<compile_context>
chip_gen: v6e
topology: v6e:2x2x1
jax: 0.10.0
libtpu: 0.0.40
codegen_flags: <defaults>
</compile_context>

<pallas_src>
import functools

import jax
import jax.numpy as jnp
from jax.experimental import pallas as pl
from jax.experimental.pallas import tpu as pltpu


def _mlp_kernel(x_ref, w1T_ref, b1_ref, w2T_ref, b2_ref, w3_ref, b3_ref, o_ref,
                *, sub_b, n_sub, matmul_dtype):
    # x_ref:   [TILE_B, F]  natural batch-major layout, streamed per grid step
    # w1T_ref: [H1, F], w2T_ref: [H2, H1]   -- VMEM-resident (constant index_map)
    # b1_ref:  [H1, 1], b2_ref: [H2, 1], w3_ref: [H2, 1], b3_ref: [1, 1]  (f32)
    # o_ref:   [1, TILE_B]  lane-dense output slab
    #
    # Static inner loop over sub_b-column slices: big DMA tile, small live
    # intermediates (bounds VMEM/vreg pressure on v7x).
    for j in range(n_sub):
        lo, hi = j * sub_b, (j + 1) * sub_b
        x_blk = x_ref[lo:hi, :].astype(matmul_dtype)               # [sub_b, F]

        # fc1 + ReLU:  h1^T = W1^T @ x^T  == contract feature dim of both
        # operands (q@k^T pattern) -> no transposed copy of x ever exists.
        h1 = jax.lax.dot_general(
            w1T_ref[...], x_blk, (((1,), (1,)), ((), ())),
            preferred_element_type=jnp.float32)                    # [H1, sub_b] f32
        h1 = jnp.maximum(h1 + b1_ref[...], 0.0)

        # fc2 + ReLU (MXU, f32 accumulation)
        h2 = jnp.dot(w2T_ref[...], h1.astype(matmul_dtype),
                     preferred_element_type=jnp.float32)           # [H2, sub_b] f32
        h2 = jnp.maximum(h2 + b2_ref[...], 0.0)

        # fc3 as VPU multiply + cross-sublane reduction (cheaper than a 1-row
        # MXU pass):  z = w3^T @ h2^T
        z = jnp.sum(h2 * w3_ref[...], axis=0, keepdims=True) + b3_ref[...]  # [1, sub_b]

        # Exact sigmoid (memory-bound kernel -> exact divide is free).
        o_ref[:, lo:hi] = 1.0 / (1.0 + jnp.exp(-z))


def mlp_forward(x, w1, b1, w2, b2, w3, b3, *, tile_b=8192, sub_b=2048,
                matmul_dtype=jnp.bfloat16):
    """x: [B, F] (any float dtype; pass bf16 x to halve HBM traffic).
    Weights stored as [in, out]; biases as [1, out].  Returns [B, 1] float32."""
    B, F = x.shape
    H1 = w1.shape[1]
    H2 = w2.shape[1]
    O = w3.shape[1]
    assert O == 1

    # Batch tile: multiple of 128, never padded up for tiny batches, and split
    # in two when it would otherwise be a single tile so v7x's second
    # TensorCore gets work (no-op on v5e/v6e).
    bp128 = pl.cdiv(B, 128) * 128
    tile_b = max(128, min(int(tile_b), bp128))
    tile_b = (tile_b // 128) * 128
    if tile_b >= bp128 and bp128 >= 256:
        tile_b = pl.cdiv(bp128 // 2, 128) * 128
    n_tiles = pl.cdiv(B, tile_b)
    Bp = n_tiles * tile_b            # padded output width -> all out blocks full

    # Compute sub-slice: largest multiple of 128 that divides tile_b and is
    # <= the requested sub_b (keeps h1/h2 intermediates to a few MiB).
    k = tile_b // 128
    d_max = max(1, min(k, max(128, int(sub_b)) // 128))
    d = max(dd for dd in range(1, d_max + 1) if k % dd == 0)
    sub_b = d * 128
    n_sub = tile_b // sub_b

    # Only the (tiny) weights get re-laid-out / cast in the wrapper; x is used
    # as-is (no extra HBM round trip over the batch).
    w1T = w1.T.astype(matmul_dtype)                  # [H1, F]
    w2T = w2.T.astype(matmul_dtype)                  # [H2, H1]
    b1c = b1.reshape(H1, 1).astype(jnp.float32)
    b2c = b2.reshape(H2, 1).astype(jnp.float32)
    w3c = w3.reshape(H2, 1).astype(jnp.float32)
    b3c = b3.reshape(1, 1).astype(jnp.float32)

    kernel = functools.partial(_mlp_kernel, sub_b=sub_b, n_sub=n_sub,
                               matmul_dtype=matmul_dtype)

    out = pl.pallas_call(
        kernel,
        out_shape=jax.ShapeDtypeStruct((1, Bp), jnp.float32),
        grid_spec=pltpu.PrefetchScalarGridSpec(
            num_scalar_prefetch=0,
            grid=(n_tiles,),
            in_specs=[
                pl.BlockSpec((tile_b, F), lambda i: (i, 0)),   # x streams over batch
                pl.BlockSpec((H1, F), lambda i: (0, 0)),       # weights/biases: resident
                pl.BlockSpec((H1, 1), lambda i: (0, 0)),
                pl.BlockSpec((H2, H1), lambda i: (0, 0)),
                pl.BlockSpec((H2, 1), lambda i: (0, 0)),
                pl.BlockSpec((H2, 1), lambda i: (0, 0)),
                pl.BlockSpec((1, 1), lambda i: (0, 0)),
            ],
            out_specs=pl.BlockSpec((1, tile_b), lambda i: (0, i)),
        ),
        compiler_params=pltpu.CompilerParams(
            dimension_semantics=("parallel",),        # batch tiles over v7x's 2 TCs
            vmem_limit_bytes=48 * 1024 * 1024,        # safe on v7x (64 MiB physical)
        ),
    )(x, w1T, b1c, w2T, b2c, w3c, b3c)

    return out[0, :B].reshape(B, O)


def init_params(key, input_size, hidden_size1, hidden_size2, output_size):
    """Deterministic synthetic parameters (Kaiming-uniform-ish like nn.Linear)."""
    ks = jax.random.split(key, 6)

    def linear(kw, kb, fan_in, fan_out):
        bound = 1.0 / jnp.sqrt(jnp.float32(fan_in))
        w = jax.random.uniform(kw, (fan_in, fan_out), jnp.float32, -bound, bound)
        b = jax.random.uniform(kb, (1, fan_out), jnp.float32, -bound, bound)
        return w, b

    w1, b1 = linear(ks[0], ks[1], input_size, hidden_size1)
    w2, b2 = linear(ks[2], ks[3], hidden_size1, hidden_size2)
    w3, b3 = linear(ks[4], ks[5], hidden_size2, output_size)
    return w1, b1, w2, b2, w3, b3


def mlp_reference(x, w1, b1, w2, b2, w3, b3):
    h1 = jax.nn.relu(x @ w1 + b1)
    h2 = jax.nn.relu(h1 @ w2 + b2)
    return jax.nn.sigmoid(h2 @ w3 + b3)


if __name__ == "__main__":
    input_size = 16     # stands in for X_train.shape[1]
    hidden_size1 = 128
    hidden_size2 = 64
    output_size = 1
    batch = 8

    key = jax.random.PRNGKey(0)
    kx, kp, kx2 = jax.random.split(key, 3)
    x = jax.random.normal(kx, (batch, input_size), jnp.float32)
    params = init_params(kp, input_size, hidden_size1, hidden_size2, output_size)
    ref = mlp_reference(x, *params)

    # Default path: bf16 MXU operands, f32 everything else.
    out = jax.block_until_ready(mlp_forward(x, *params))
    assert out.shape == (batch, output_size)
    assert jnp.allclose(out, ref, atol=3e-2, rtol=3e-2)

    # Full-f32 path (exact sigmoid, f32 MXU) — tight tolerance.
    out_f32 = jax.block_until_ready(mlp_forward(x, *params, matmul_dtype=jnp.float32))
    assert jnp.allclose(out_f32, ref, atol=1e-4, rtol=1e-4)

    # Multi-tile / ragged-batch / inner-sub-loop path (2 grid steps, n_sub=2,
    # last x block partially out of bounds — outputs beyond B are sliced off).
    B2 = 300
    x2 = jax.random.normal(kx2, (B2, input_size), jnp.float32)
    ref2 = mlp_reference(x2, *params)
    out2 = jax.block_until_ready(
        mlp_forward(x2, *params, tile_b=256, sub_b=128, matmul_dtype=jnp.float32))
    assert out2.shape == (B2, output_size)
    assert jnp.allclose(out2, ref2, atol=1e-4, rtol=1e-4)

    print("KERNEL_OK")
</pallas_src>

<mosaic_0001>
module attributes {stable_mosaic.version = 11 : i64} {
  func.func @_mlp_kernel(%arg0: i32, %arg1: memref<128x16xf32, #tpu.memory_space<vmem>>, %arg2: memref<128x16xbf16, #tpu.memory_space<vmem>>, %arg3: memref<128x1xf32, #tpu.memory_space<vmem>>, %arg4: memref<64x128xbf16, #tpu.memory_space<vmem>>, %arg5: memref<64x1xf32, #tpu.memory_space<vmem>>, %arg6: memref<64x1xf32, #tpu.memory_space<vmem>>, %arg7: memref<1x1xf32, #tpu.memory_space<vmem>>, %arg8: memref<1x128xf32, #tpu.memory_space<vmem>>) attributes {dimension_semantics = [#tpu.dimension_semantics<parallel>], iteration_bounds = array<i64: 1>, scalar_prefetch = 0 : i64, scratch_operands = 0 : i64, tpu.core_type = #tpu.core_type<tc>, window_params = [{transform_indices = @transform_0, window_bounds = array<i64: 128, 16>}, {pipeline_mode = #tpu.pipeline_mode<synchronous>, transform_indices = @transform_1, window_bounds = array<i64: 128, 16>}, {pipeline_mode = #tpu.pipeline_mode<synchronous>, transform_indices = @transform_2, window_bounds = array<i64: 128, 1>}, {pipeline_mode = #tpu.pipeline_mode<synchronous>, transform_indices = @transform_3, window_bounds = array<i64: 64, 128>}, {pipeline_mode = #tpu.pipeline_mode<synchronous>, transform_indices = @transform_4, window_bounds = array<i64: 64, 1>}, {pipeline_mode = #tpu.pipeline_mode<synchronous>, transform_indices = @transform_5, window_bounds = array<i64: 64, 1>}, {pipeline_mode = #tpu.pipeline_mode<synchronous>, transform_indices = @transform_6, window_bounds = array<i64: 1, 1>}, {transform_indices = @transform_7, window_bounds = array<i64: 1, 128>}]} {
    %c0 = arith.constant 0 : index
    %c0_0 = arith.constant 0 : index
    %0 = vector.load %arg1[%c0, %c0_0] : memref<128x16xf32, #tpu.memory_space<vmem>>, vector<128x16xf32>
    %1 = arith.truncf %0 : vector<128x16xf32> to vector<128x16xbf16>
    %c0_1 = arith.constant 0 : index
    %c0_2 = arith.constant 0 : index
    %2 = vector.load %arg2[%c0_1, %c0_2] : memref<128x16xbf16, #tpu.memory_space<vmem>>, vector<128x16xbf16>
    %cst = arith.constant dense<0.000000e+00> : vector<128x128xf32>
    %3 = tpu.matmul %2, %1, %cst {dimension_numbers = #tpu.dot_dimension_numbers<[1], [1], [0], [0], [0, 0, 1, 0], [], []>} : vector<128x16xbf16>, vector<128x16xbf16>, vector<128x128xf32> -> vector<128x128xf32>
    %c0_3 = arith.constant 0 : index
    %c0_4 = arith.constant 0 : index
    %4 = vector.load %arg3[%c0_3, %c0_4] : memref<128x1xf32, #tpu.memory_space<vmem>>, vector<128x1xf32>
    %5 = vector.broadcast %4 : vector<128x1xf32> to vector<128x128xf32>
    %6 = arith.addf %3, %5 : vector<128x128xf32>
    %cst_5 = arith.constant 0.000000e+00 : f32
    %7 = vector.broadcast %cst_5 : f32 to vector<128x128xf32>
    %8 = arith.maximumf %6, %7 : vector<128x128xf32>
    %c0_6 = arith.constant 0 : index
    %c0_7 = arith.constant 0 : index
    %9 = vector.load %arg4[%c0_6, %c0_7] : memref<64x128xbf16, #tpu.memory_space<vmem>>, vector<64x128xbf16>
    %10 = arith.truncf %8 : vector<128x128xf32> to vector<128x128xbf16>
    %cst_8 = arith.constant dense<0.000000e+00> : vector<64x128xf32>
    %11 = tpu.matmul %9, %10, %cst_8 {dimension_numbers = #tpu.dot_dimension_numbers<[1], [0], [0], [1], [0, 0, 1, 1], [], []>} : vector<64x128xbf16>, vector<128x128xbf16>, vector<64x128xf32> -> vector<64x128xf32>
    %c0_9 = arith.constant 0 : index
    %c0_10 = arith.constant 0 : index
    %12 = vector.load %arg5[%c0_9, %c0_10] : memref<64x1xf32, #tpu.memory_space<vmem>>, vector<64x1xf32>
    %13 = vector.broadcast %12 : vector<64x1xf32> to vector<64x128xf32>
    %14 = arith.addf %11, %13 : vector<64x128xf32>
    %cst_11 = arith.constant 0.000000e+00 : f32
    %15 = vector.broadcast %cst_11 : f32 to vector<64x128xf32>
    %16 = arith.maximumf %14, %15 : vector<64x128xf32>
    %c0_12 = arith.constant 0 : index
    %c0_13 = arith.constant 0 : index
    %17 = vector.load %arg6[%c0_12, %c0_13] : memref<64x1xf32, #tpu.memory_space<vmem>>, vector<64x1xf32>
    %18 = vector.broadcast %17 : vector<64x1xf32> to vector<64x128xf32>
    %19 = arith.mulf %16, %18 : vector<64x128xf32>
    %cst_14 = arith.constant dense<0.000000e+00> : vector<128xf32>
    %20 = vector.multi_reduction <add>, %19, %cst_14 [0] : vector<64x128xf32> to vector<128xf32>
    %21 = vector.shape_cast %20 : vector<128xf32> to vector<1x128xf32>
    %c0_15 = arith.constant 0 : index
    %c0_16 = arith.constant 0 : index
    %22 = vector.load %arg7[%c0_15, %c0_16] : memref<1x1xf32, #tpu.memory_space<vmem>>, vector<1x1xf32>
    %23 = vector.broadcast %22 : vector<1x1xf32> to vector<1x128xf32>
    %24 = arith.addf %21, %23 : vector<1x128xf32>
    %cst_17 = arith.constant 0.000000e+00 : f32
    %25 = vector.broadcast %cst_17 : f32 to vector<1x128xf32>
    %26 = arith.subf %25, %24 : vector<1x128xf32>
    %27 = math.exp %26 : vector<1x128xf32>
    %cst_18 = arith.constant 1.000000e+00 : f32
    %28 = vector.broadcast %cst_18 : f32 to vector<1x128xf32>
    %29 = arith.addf %28, %27 : vector<1x128xf32>
    %cst_19 = arith.constant 1.000000e+00 : f32
    %30 = vector.broadcast %cst_19 : f32 to vector<1x128xf32>
    %31 = arith.divf %30, %29 : vector<1x128xf32>
    %c0_20 = arith.constant 0 : index
    %c0_21 = arith.constant 0 : index
    %32 = vector.load %arg8[%c0_20, %c0_21] : memref<1x128xf32, #tpu.memory_space<vmem>>, vector<1x128xf32>
    tpu.vector_store %arg8[%c0_20, %c0_21], %31 {strides = array<i32>} : memref<1x128xf32, #tpu.memory_space<vmem>>, vector<1x128xf32>,
    return
  }
  func.func @transform_0(%arg0: i32) -> (i32, i32) {
    %c0_i32 = arith.constant 0 : i32
    %c0_i32_0 = arith.constant 0 : i32
    return %arg0, %c0_i32 : i32, i32
  }
  func.func @transform_1(%arg0: i32) -> (i32, i32) {
    %c0_i32 = arith.constant 0 : i32
    %c0_i32_0 = arith.constant 0 : i32
    %c0_i32_1 = arith.constant 0 : i32
    return %c0_i32, %c0_i32_0 : i32, i32
  }
  func.func @transform_2(%arg0: i32) -> (i32, i32) {
    %c0_i32 = arith.constant 0 : i32
    %c0_i32_0 = arith.constant 0 : i32
    %c0_i32_1 = arith.constant 0 : i32
    return %c0_i32, %c0_i32_0 : i32, i32
  }
  func.func @transform_3(%arg0: i32) -> (i32, i32) {
    %c0_i32 = arith.constant 0 : i32
    %c0_i32_0 = arith.constant 0 : i32
    %c0_i32_1 = arith.constant 0 : i32
    return %c0_i32, %c0_i32_0 : i32, i32
  }
  func.func @transform_4(%arg0: i32) -> (i32, i32) {
    %c0_i32 = arith.constant 0 : i32
    %c0_i32_0 = arith.constant 0 : i32
    %c0_i32_1 = arith.constant 0 : i32
    return %c0_i32, %c0_i32_0 : i32, i32
  }
  func.func @transform_5(%arg0: i32) -> (i32, i32) {
    %c0_i32 = arith.constant 0 : i32
    %c0_i32_0 = arith.constant 0 : i32
    %c0_i32_1 = arith.constant 0 : i32
    return %c0_i32, %c0_i32_0 : i32, i32
  }
  func.func @transform_6(%arg0: i32) -> (i32, i32) {
    %c0_i32 = arith.constant 0 : i32
    %c0_i32_0 = arith.constant 0 : i32
    %c0_i32_1 = arith.constant 0 : i32
    return %c0_i32, %c0_i32_0 : i32, i32
  }
  func.func @transform_7(%arg0: i32) -> (i32, i32) {
    %c0_i32 = arith.constant 0 : i32
    %c0_i32_0 = arith.constant 0 : i32
    return %c0_i32, %arg0 : i32, i32
  }
}

</mosaic_0001>

<llo_original>
// kernel: tpu_custom_call.1
$region0: #{tpu_custom_call.1}
  #allocation0 [shape = 'u32[]', space=smem, size = 0x4, offset = 0x4, fixed_abs, tag = 'smem constant byte address 0x4 - core index']
  #allocation1 [shape = 'u32[144,128]{1,0:T(1,128)}', space=vmem, size = 0x12000, scoped, tag = 'internal scratch']
  #allocation2 [shape = 'f32[1,1]{1,0:T(1,128)S(1)}', space=vmem, size = 0x200, scoped, tag = 'scoped memory for tpu_custom_call.1']
  %s0 = inlined_call_operand.vmem [shape: f32[8,16], index: 0, kind: input, shape index: {}]
  %s1 = inlined_call_operand.vmem [shape: bf16[128,16], index: 1, kind: input, shape index: {}]
  %s2 = inlined_call_operand.vmem [shape: f32[128,1], index: 2, kind: input, shape index: {}]
  %s3 = inlined_call_operand.vmem [shape: bf16[64,128], index: 3, kind: input, shape index: {}]
  %s4 = inlined_call_operand.vmem [shape: f32[64,1], index: 4, kind: input, shape index: {}]
  %s5 = inlined_call_operand.vmem [shape: f32[64,1], index: 5, kind: input, shape index: {}]
  %s6 = inlined_call_operand.<no memory space> [shape: f32[1,1], index: 6, kind: input, shape index: {}]
  %s7 = inlined_call_operand.hbm [shape: f32[1,128], index: 7, kind: output, shape index: {}]
  %s8 = sld [smem:[#allocation0]]
  $region38: #{tpu_custom_call.1} parent=0
    _
  %s10 = ssub.s32 1, %s8
  %s11 = scalar_select 0, %s10, %s8
  %v12 = vstv %s6
  %13 = vst [vmem:[#allocation2] sm:$0x1] %v12
  $region1: #{tpu_custom_call.1} parent=0
    #allocation3 [shape = 'u8[512]{0}', space=vmem, size = 0x400, scoped, tag = 'output window, operand 0, single buffered']
    #allocation4 [shape = 's32[1]{0}', space=sflag, size = 0x4, scoped, tag = 'scoped memory for tpu_custom_call.1']
    %14 = vsyncpa [#allocation4], 0
    // Predicated region
    $region2: #{tpu_custom_call.1} parent=1 // pred_check
      _
    $region3: #{tpu_custom_call.1} parent=1 // pred_check_branch
      %16 = sbr.rel (0) target = $region5
    $region4: #{tpu_custom_call.1} parent=1 // pred_region
      _
    $region5: #{tpu_custom_call.1} parent=1 // pred_fallthru
      _
    // Predicated region
    $region6: #{tpu_custom_call.1} parent=1 // pred_check
      _
    $region7: #{tpu_custom_call.1} parent=1 // pred_check_branch
      %18 = sbr.rel (0) target = $region9
    $region8: #{tpu_custom_call.1} parent=1 // pred_region
      _
    $region9: #{tpu_custom_call.1} parent=1 // pred_fallthru
      _
    // Predicated region
    $region10: #{tpu_custom_call.1} parent=1 // pred_check
      _
    $region11: #{tpu_custom_call.1} parent=1 // pred_check_branch
      %20 = sbr.rel (0) target = $region13
    $region12: #{tpu_custom_call.1} parent=1 // pred_region
      _
    $region13: #{tpu_custom_call.1} parent=1 // pred_fallthru
      _
    // Predicated region
    $region14: #{tpu_custom_call.1} parent=1 // pred_check
      _
    $region15: #{tpu_custom_call.1} parent=1 // pred_check_branch
      %22 = sbr.rel (0) target = $region17
    $region16: #{tpu_custom_call.1} parent=1 // pred_region
      _
    $region17: #{tpu_custom_call.1} parent=1 // pred_fallthru
      _
    // Predicated region
    $region18: #{tpu_custom_call.1} parent=1 // pred_check
      _
    $region19: #{tpu_custom_call.1} parent=1 // pred_check_branch
      %24 = sbr.rel (0) target = $region21
    $region20: #{tpu_custom_call.1} parent=1 // pred_region
      _
    $region21: #{tpu_custom_call.1} parent=1 // pred_fallthru
      _
    // Predicated region
    $region22: #{tpu_custom_call.1} parent=1 // pred_check
      _
    $region23: #{tpu_custom_call.1} parent=1 // pred_check_branch
      %26 = sbr.rel (0) target = $region25
    $region24: #{tpu_custom_call.1} parent=1 // pred_region
      _
    $region25: #{tpu_custom_call.1} parent=1 // pred_fallthru
      _
    // Predicated region
    $region26: #{tpu_custom_call.1} parent=1 // pred_check
      _
    $region27: #{tpu_custom_call.1} parent=1 // pred_check_branch
      %28 = sbr.rel (0) target = $region29
    $region28: #{tpu_custom_call.1} parent=1 // pred_region
      _
    $region29: #{tpu_custom_call.1} parent=1 // pred_fallthru
      _
    %v30 = vld [vmem:[%s0] sm:$0xff]
    %v31 = vld [vmem:[%s0 + $0x8] sm:$0xff]
    %v32 = vld [vmem:[%s0 + $0x10] sm:$0xff]
    %v33 = vld [vmem:[%s0 + $0x18] sm:$0xff]
    %v34 = vld [vmem:[%s0 + $0x20] sm:$0xff]
    %v35 = vld [vmem:[%s0 + $0x28] sm:$0xff]
    %v36 = vld [vmem:[%s0 + $0x30] sm:$0xff]
    %v37 = vld [vmem:[%s0 + $0x38] sm:$0xff]
    %v38 = vld [vmem:[%s0 + $0x40] sm:$0xff]
    %v39 = vld [vmem:[%s0 + $0x48] sm:$0xff]
    %v40 = vld [vmem:[%s0 + $0x50] sm:$0xff]
    %v41 = vld [vmem:[%s0 + $0x58] sm:$0xff]
    %v42 = vld [vmem:[%s0 + $0x60] sm:$0xff]
    %v43 = vld [vmem:[%s0 + $0x68] sm:$0xff]
    %v44 = vld [vmem:[%s0 + $0x70] sm:$0xff]
    %v45 = vld [vmem:[%s0 + $0x78] sm:$0xff]
    %v46 = vpack.c.bf16 %v31, %v30
    %v47 = vpack.c.bf16 %v33, %v32
    %v48 = vpack.c.bf16 %v35, %v34
    %v49 = vpack.c.bf16 %v37, %v36
    %v50 = vpack.c.bf16 %v39, %v38
    %v51 = vpack.c.bf16 %v41, %v40
    %v52 = vpack.c.bf16 %v43, %v42
    %v53 = vpack.c.bf16 %v45, %v44
    %v54 = vld [vmem:[%s1] sm:$0xf]
    %v55 = vld [vmem:[%s1 + $0x4] sm:$0xf]
    %v56 = vld [vmem:[%s1 + $0x8] sm:$0xf]
    %v57 = vld [vmem:[%s1 + $0xc] sm:$0xf]
    %v58 = vld [vmem:[%s1 + $0x10] sm:$0xf]
    %v59 = vld [vmem:[%s1 + $0x14] sm:$0xf]
    %v60 = vld [vmem:[%s1 + $0x18] sm:$0xf]
    %v61 = vld [vmem:[%s1 + $0x1c] sm:$0xf]
    %v62 = vld [vmem:[%s1 + $0x20] sm:$0xf]
    %v63 = vld [vmem:[%s1 + $0x24] sm:$0xf]
    %v64 = vld [vmem:[%s1 + $0x28] sm:$0xf]
    %v65 = vld [vmem:[%s1 + $0x2c] sm:$0xf]
    %v66 = vld [vmem:[%s1 + $0x30] sm:$0xf]
    %v67 = vld [vmem:[%s1 + $0x34] sm:$0xf]
    %v68 = vld [vmem:[%s1 + $0x38] sm:$0xf]
    %v69 = vld [vmem:[%s1 + $0x3c] sm:$0xf]
    %v70 = vld [vmem:[%s2] sm:$0xff]
    %v71 = vld [vmem:[%s2 + $0x8] sm:$0xff]
    %v72 = vld [vmem:[%s2 + $0x10] sm:$0xff]
    %v73 = vld [vmem:[%s2 + $0x18] sm:$0xff]
    %v74 = vld [vmem:[%s2 + $0x20] sm:$0xff]
    %v75 = vld [vmem:[%s2 + $0x28] sm:$0xff]
    %v76 = vld [vmem:[%s2 + $0x30] sm:$0xff]
    %v77 = vld [vmem:[%s2 + $0x38] sm:$0xff]
    %v78 = vld [vmem:[%s2 + $0x40] sm:$0xff]
    %v79 = vld [vmem:[%s2 + $0x48] sm:$0xff]
    %v80 = vld [vmem:[%s2 + $0x50] sm:$0xff]
    %v81 = vld [vmem:[%s2 + $0x58] sm:$0xff]
    %v82 = vld [vmem:[%s2 + $0x60] sm:$0xff]
    %v83 = vld [vmem:[%s2 + $0x68] sm:$0xff]
    %v84 = vld [vmem:[%s2 + $0x70] sm:$0xff]
    %v85 = vld [vmem:[%s2 + $0x78] sm:$0xff]
    %87 = vset.pattern.permute.xlu0 0
    %88 = vperm.xlu0 %87, %v70
    %v89 = vpop.permute.xlu0 %88
    %92 = vset.pattern.permute.xlu0 0
    %93 = vperm.xlu0 %92, %v71
    %v94 = vpop.permute.xlu0 %93
    %97 = vset.pattern.permute.xlu0 0
    %98 = vperm.xlu0 %97, %v72
    %v99 = vpop.permute.xlu0 %98
    %102 = vset.pattern.permute.xlu0 0
    %103 = vperm.xlu0 %102, %v73
    %v104 = vpop.permute.xlu0 %103
    %107 = vset.pattern.permute.xlu0 0
    %108 = vperm.xlu0 %107, %v74
    %v109 = vpop.permute.xlu0 %108
    %112 = vset.pattern.permute.xlu0 0
    %113 = vperm.xlu0 %112, %v75
    %v114 = vpop.permute.xlu0 %113
    %117 = vset.pattern.permute.xlu0 0
    %118 = vperm.xlu0 %117, %v76
    %v119 = vpop.permute.xlu0 %118
    %122 = vset.pattern.permute.xlu0 0
    %123 = vperm.xlu0 %122, %v77
    %v124 = vpop.permute.xlu0 %123
    %127 = vset.pattern.permute.xlu0 0
    %128 = vperm.xlu0 %127, %v78
    %v129 = vpop.permute.xlu0 %128
    %132 = vset.pattern.permute.xlu0 0
    %133 = vperm.xlu0 %132, %v79
    %v134 = vpop.permute.xlu0 %133
    %137 = vset.pattern.permute.xlu0 0
    %138 = vperm.xlu0 %137, %v80
    %v139 = vpop.permute.xlu0 %138
    %142 = vset.pattern.permute.xlu0 0
    %143 = vperm.xlu0 %142, %v81
    %v144 = vpop.permute.xlu0 %143
    %147 = vset.pattern.permute.xlu0 0
    %148 = vperm.xlu0 %147, %v82
    %v149 = vpop.permute.xlu0 %148
    %152 = vset.pattern.permute.xlu0 0
    %153 = vperm.xlu0 %152, %v83
    %v154 = vpop.permute.xlu0 %153
    %157 = vset.pattern.permute.xlu0 0
    %158 = vperm.xlu0 %157, %v84
    %v159 = vpop.permute.xlu0 %158
    %162 = vset.pattern.permute.xlu0 0
    %163 = vperm.xlu0 %162, %v85
    %v164 = vpop.permute.xlu0 %163
    %v182 = vunpack.c.l.b16 %v54
    %v183 = vunpack.c.l.b16 %v55
    %v184 = vunpack.c.l.b16 %v56
    %v185 = vunpack.c.l.b16 %v57
    %v186 = vunpack.c.l.b16 %v58
    %v187 = vunpack.c.l.b16 %v59
    %v188 = vunpack.c.l.b16 %v60
    %v189 = vunpack.c.l.b16 %v61
    %v190 = vunpack.c.l.b16 %v62
    %v191 = vunpack.c.l.b16 %v63
    %v192 = vunpack.c.l.b16 %v64
    %v193 = vunpack.c.l.b16 %v65
    %v194 = vunpack.c.l.b16 %v66
    %v195 = vunpack.c.l.b16 %v67
    %v196 = vunpack.c.l.b16 %v68
    %v197 = vunpack.c.l.b16 %v69
    %v198 = vpack.c.b16 %v183, %v182
    %v199 = vpack.c.b16 %v185, %v184
    %v200 = vpack.c.b16 %v187, %v186
    %v201 = vpack.c.b16 %v189, %v188
    %v202 = vpack.c.b16 %v191, %v190
    %v203 = vpack.c.b16 %v193, %v192
    %v204 = vpack.c.b16 %v195, %v194
    %v205 = vpack.c.b16 %v197, %v196
    %vm206 = vcmask 130048
    %v208 = vsel %vm206, %v198, 0
    %v211 = vsel %vm206, %v199, 0
    %v214 = vsel %vm206, %v200, 0
    %v217 = vsel %vm206, %v201, 0
    %v220 = vsel %vm206, %v202, 0
    %v223 = vsel %vm206, %v203, 0
    %v226 = vsel %vm206, %v204, 0
    %v229 = vsel %vm206, %v205, 0
    %v232 = vsel %vm206, %v46, 0
    %v235 = vsel %vm206, %v47, 0
    %v238 = vsel %vm206, %v48, 0
    %v241 = vsel %vm206, %v49, 0
    %v244 = vsel %vm206, %v50, 0
    %v247 = vsel %vm206, %v51, 0
    %v250 = vsel %vm206, %v52, 0
    %v253 = vsel %vm206, %v53, 0
    %255 = vmatprep.subr.bf16.mxu0 0
    %256 = vmatpush1.bf16.xpose.msra.mxu0 %v253
    %257 = vmatprep.subr.bf16.mxu0 0
    %258 = vmatpush1.bf16.xpose.msra.mxu0 %v250
    %259 = vmatprep.subr.bf16.mxu0 0
    %260 = vmatpush1.bf16.xpose.msra.mxu0 %v247
    %261 = vmatprep.subr.bf16.mxu0 0
    %262 = vmatpush1.bf16.xpose.msra.mxu0 %v244
    %263 = vmatprep.subr.bf16.mxu0 0
    %264 = vmatpush1.bf16.xpose.msra.mxu0 %v241
    %265 = vmatprep.subr.bf16.mxu0 0
    %266 = vmatpush1.bf16.xpose.msra.mxu0 %v238
    %267 = vmatprep.subr.bf16.mxu0 0
    %268 = vmatpush1.bf16.xpose.msra.mxu0 %v235
    %269 = vmatprep.subr.bf16.mxu0 0
    %270 = vmatpush1.bf16.xpose.msra.mxu0 %v232
    %271 = vmatprep.subr.bf16.mxu0 0
    %272 = vmatpush2.bf16.xpose.msra.mxu0 0
    %273 = vmatprep.subr.bf16.mxu0 0
    %274 = vmatpush2.bf16.xpose.msra.mxu0 0
    %275 = vmatprep.subr.bf16.mxu0 0
    %276 = vmatpush2.bf16.xpose.msra.mxu0 0
    %277 = vmatprep.subr.bf16.mxu0 0
    %278 = vmatpush2.bf16.xpose.msra.mxu0 0
    %279 = vmatprep.subr.bf16.mxu0 0
    %280 = vmatpush2.bf16.xpose.msra.mxu0 0
    %281 = vmatprep.subr.bf16.mxu0 0
    %282 = vmatpush2.bf16.xpose.msra.mxu0 0
    %283 = vmatprep.subr.bf16.mxu0 0
    %284 = vmatpush2.bf16.xpose.msra.mxu0 0
    %285 = vmatprep.subr.bf16.mxu0 0
    %286 = vmatpush2.bf16.xpose.msra.mxu0 0
    %287 = vmatprep.mubr.bf16.mxu0 0
    %288 = vmatmul.mubr.bf16.gmra.mxu0 %v208
    %v289 = vpop.f32.mrf.mxu0
    %v290 = vadd.f32 %v89, %v289
    %v291 = vpop.f32.mrf.mxu0
    %v292 = vpop.f32.mrf.mxu0
    %v293 = vadd.f32 %v94, %v292
    %v294 = vpop.f32.mrf.mxu0
    %295 = vmatprep.mubr.bf16.mxu0 0
    %296 = vmatmul.mubr.bf16.gmra.mxu0 %v211
    %v297 = vpop.f32.mrf.mxu0
    %v298 = vadd.f32 %v99, %v297
    %v299 = vpop.f32.mrf.mxu0
    %v300 = vpop.f32.mrf.mxu0
    %v301 = vadd.f32 %v104, %v300
    %v302 = vpop.f32.mrf.mxu0
    %303 = vmatprep.mubr.bf16.mxu0 0
    %304 = vmatmul.mubr.bf16.gmra.mxu0 %v214
    %v305 = vpop.f32.mrf.mxu0
    %v306 = vadd.f32 %v109, %v305
    %v307 = vpop.f32.mrf.mxu0
    %v308 = vpop.f32.mrf.mxu0
    %v309 = vadd.f32 %v114, %v308
    %v310 = vpop.f32.mrf.mxu0
    %311 = vmatprep.mubr.bf16.mxu0 0
    %312 = vmatmul.mubr.bf16.gmra.mxu0 %v217
    %v313 = vpop.f32.mrf.mxu0
    %v314 = vadd.f32 %v119, %v313
    %v315 = vpop.f32.mrf.mxu0
    %v316 = vpop.f32.mrf.mxu0
    %v317 = vadd.f32 %v124, %v316
    %v318 = vpop.f32.mrf.mxu0
    %319 = vmatprep.mubr.bf16.mxu0 0
    %320 = vmatmul.mubr.bf16.gmra.mxu0 %v220
    %v321 = vpop.f32.mrf.mxu0
    %v322 = vadd.f32 %v129, %v321
    %v323 = vpop.f32.mrf.mxu0
    %v324 = vpop.f32.mrf.mxu0
    %v325 = vadd.f32 %v134, %v324
    %v326 = vpop.f32.mrf.mxu0
    %327 = vmatprep.mubr.bf16.mxu0 0
    %328 = vmatmul.mubr.bf16.gmra.mxu0 %v223
    %v329 = vpop.f32.mrf.mxu0
    %v330 = vadd.f32 %v139, %v329
    %v331 = vpop.f32.mrf.mxu0
    %v332 = vpop.f32.mrf.mxu0
    %v333 = vadd.f32 %v144, %v332
    %v334 = vpop.f32.mrf.mxu0
    %335 = vmatprep.mubr.bf16.mxu0 0
    %336 = vmatmul.mubr.bf16.gmra.mxu0 %v226
    %v337 = vpop.f32.mrf.mxu0
    %v338 = vadd.f32 %v149, %v337
    %v339 = vpop.f32.mrf.mxu0
    %v340 = vpop.f32.mrf.mxu0
    %v341 = vadd.f32 %v154, %v340
    %v342 = vpop.f32.mrf.mxu0
    %343 = vmatprep.mubr.bf16.mxu0 0
    %344 = vmatmul.mubr.bf16.gmra.mxu0 %v229
    %v345 = vpop.f32.mrf.mxu0
    %v346 = vadd.f32 %v159, %v345
    %v347 = vpop.f32.mrf.mxu0
    %v348 = vpop.f32.mrf.mxu0
    %v349 = vadd.f32 %v164, %v348
    %v350 = vpop.f32.mrf.mxu0
    %351 = vdwg.mxu0
    %v352 = vmax.f32 %v290, 0.0
    %v353 = vmax.f32 %v293, 0.0
    %v354 = vmax.f32 %v298, 0.0
    %v355 = vmax.f32 %v301, 0.0
    %v356 = vmax.f32 %v306, 0.0
    %v357 = vmax.f32 %v309, 0.0
    %v358 = vmax.f32 %v314, 0.0
    %v359 = vmax.f32 %v317, 0.0
    %v360 = vmax.f32 %v322, 0.0
    %v361 = vmax.f32 %v325, 0.0
    %v362 = vmax.f32 %v330, 0.0
    %v363 = vmax.f32 %v333, 0.0
    %v364 = vmax.f32 %v338, 0.0
    %v365 = vmax.f32 %v341, 0.0
    %v366 = vmax.f32 %v346, 0.0
    %v367 = vmax.f32 %v349, 0.0
    %v368 = vld [vmem:[%s3] sm:$0xf]
    %v369 = vld [vmem:[%s3 + $0x4] sm:$0xf]
    %v370 = vld [vmem:[%s3 + $0x8] sm:$0xf]
    %v371 = vld [vmem:[%s3 + $0xc] sm:$0xf]
    %v372 = vld [vmem:[%s3 + $0x10] sm:$0xf]
    %v373 = vld [vmem:[%s3 + $0x14] sm:$0xf]
    %v374 = vld [vmem:[%s3 + $0x18] sm:$0xf]
    %v375 = vld [vmem:[%s3 + $0x1c] sm:$0xf]
    %v376 = vpack.c.bf16 %v353, %v352
    %v377 = vpack.c.bf16 %v355, %v354
    %v378 = vpack.c.bf16 %v357, %v356
    %v379 = vpack.c.bf16 %v359, %v358
    %v380 = vpack.c.bf16 %v361, %v360
    %v381 = vpack.c.bf16 %v363, %v362
    %v382 = vpack.c.bf16 %v365, %v364
    %v383 = vpack.c.bf16 %v367, %v366
    %v384 = vld [vmem:[%s4] sm:$0xff]
    %v385 = vld [vmem:[%s4 + $0x8] sm:$0xff]
    %v386 = vld [vmem:[%s4 + $0x10] sm:$0xff]
    %v387 = vld [vmem:[%s4 + $0x18] sm:$0xff]
    %v388 = vld [vmem:[%s4 + $0x20] sm:$0xff]
    %v389 = vld [vmem:[%s4 + $0x28] sm:$0xff]
    %v390 = vld [vmem:[%s4 + $0x30] sm:$0xff]
    %v391 = vld [vmem:[%s4 + $0x38] sm:$0xff]
    %393 = vset.pattern.permute.xlu0 0
    %394 = vperm.xlu0 %393, %v384
    %v395 = vpop.permute.xlu0 %394
    %398 = vset.pattern.permute.xlu0 0
    %399 = vperm.xlu0 %398, %v385
    %v400 = vpop.permute.xlu0 %399
    %403 = vset.pattern.permute.xlu0 0
    %404 = vperm.xlu0 %403, %v386
    %v405 = vpop.permute.xlu0 %404
    %408 = vset.pattern.permute.xlu0 0
    %409 = vperm.xlu0 %408, %v387
    %v410 = vpop.permute.xlu0 %409
    %413 = vset.pattern.permute.xlu0 0
    %414 = vperm.xlu0 %413, %v388
    %v415 = vpop.permute.xlu0 %414
    %418 = vset.pattern.permute.xlu0 0
    %419 = vperm.xlu0 %418, %v389
    %v420 = vpop.permute.xlu0 %419
    %423 = vset.pattern.permute.xlu0 0
    %424 = vperm.xlu0 %423, %v390
    %v425 = vpop.permute.xlu0 %424
    %428 = vset.pattern.permute.xlu0 0
    %429 = vperm.xlu0 %428, %v391
    %v430 = vpop.permute.xlu0 %429
    %v440 = vunpack.c.l.b16 %v368
    %v441 = vunpack.c.l.b16 %v369
    %v442 = vunpack.c.l.b16 %v370
    %v443 = vunpack.c.l.b16 %v371
    %v444 = vunpack.c.l.b16 %v372
    %v445 = vunpack.c.l.b16 %v373
    %v446 = vunpack.c.l.b16 %v374
    %v447 = vunpack.c.l.b16 %v375
    %v448 = vpack.c.b16 %v441, %v440
    %v449 = vpack.c.b16 %v443, %v442
    %v450 = vpack.c.b16 %v445, %v444
    %v451 = vpack.c.b16 %v447, %v446
    %456 = vmatprep.subr.bf16.mxu0 0
    %457 = vmatpush1.bf16.msra.mxu0 %v383
    %458 = vmatprep.subr.bf16.mxu0 0
    %459 = vmatpush1.bf16.msra.mxu0 %v382
    %460 = vmatprep.subr.bf16.mxu0 0
    %461 = vmatpush1.bf16.msra.mxu0 %v381
    %462 = vmatprep.subr.bf16.mxu0 0
    %463 = vmatpush1.bf16.msra.mxu0 %v380
    %464 = vmatprep.subr.bf16.mxu0 0
    %465 = vmatpush1.bf16.msra.mxu0 %v379
    %466 = vmatprep.subr.bf16.mxu0 0
    %467 = vmatpush1.bf16.msra.mxu0 %v378
    %468 = vmatprep.subr.bf16.mxu0 0
    %469 = vmatpush1.bf16.msra.mxu0 %v377
    %470 = vmatprep.subr.bf16.mxu0 0
    %471 = vmatpush1.bf16.msra.mxu0 %v376
    %472 = vmatprep.subr.bf16.mxu0 0
    %473 = vmatpush2.bf16.msra.mxu0 0
    %474 = vmatprep.subr.bf16.mxu0 0
    %475 = vmatpush2.bf16.msra.mxu0 0
    %476 = vmatprep.subr.bf16.mxu0 0
    %477 = vmatpush2.bf16.msra.mxu0 0
    %478 = vmatprep.subr.bf16.mxu0 0
    %479 = vmatpush2.bf16.msra.mxu0 0
    %480 = vmatprep.subr.bf16.mxu0 0
    %481 = vmatpush2.bf16.msra.mxu0 0
    %482 = vmatprep.subr.bf16.mxu0 0
    %483 = vmatpush2.bf16.msra.mxu0 0
    %484 = vmatprep.subr.bf16.mxu0 0
    %485 = vmatpush2.bf16.msra.mxu0 0
    %486 = vmatprep.subr.bf16.mxu0 0
    %487 = vmatpush2.bf16.msra.mxu0 0
    %488 = vmatprep.mubr.bf16.mxu0 0
    %489 = vmatmul.mubr.bf16.gmra.mxu0 %v448
    %v490 = vpop.f32.mrf.mxu0
    %v491 = vadd.f32 %v395, %v490
    %v492 = vpop.f32.mrf.mxu0
    %v493 = vpop.f32.mrf.mxu0
    %v494 = vadd.f32 %v400, %v493
    %v495 = vpop.f32.mrf.mxu0
    %496 = vmatprep.mubr.bf16.mxu0 0
    %497 = vmatmul.mubr.bf16.gmra.mxu0 %v449
    %v498 = vpop.f32.mrf.mxu0
    %v499 = vadd.f32 %v405, %v498
    %v500 = vpop.f32.mrf.mxu0
    %v501 = vpop.f32.mrf.mxu0
    %v502 = vadd.f32 %v410, %v501
    %v503 = vpop.f32.mrf.mxu0
    %504 = vmatprep.mubr.bf16.mxu0 0
    %505 = vmatmul.mubr.bf16.gmra.mxu0 %v450
    %v506 = vpop.f32.mrf.mxu0
    %v507 = vadd.f32 %v415, %v506
    %v508 = vpop.f32.mrf.mxu0
    %v509 = vpop.f32.mrf.mxu0
    %v510 = vadd.f32 %v420, %v509
    %v511 = vpop.f32.mrf.mxu0
    %512 = vmatprep.mubr.bf16.mxu0 0
    %513 = vmatmul.mubr.bf16.gmra.mxu0 %v451
    %v514 = vpop.f32.mrf.mxu0
    %v515 = vadd.f32 %v425, %v514
    %v516 = vpop.f32.mrf.mxu0
    %v517 = vpop.f32.mrf.mxu0
    %v518 = vadd.f32 %v430, %v517
    %v519 = vpop.f32.mrf.mxu0
    %520 = vdwg.mxu0
    %v521 = vmax.f32 %v491, 0.0
    %v522 = vmax.f32 %v494, 0.0
    %v523 = vmax.f32 %v499, 0.0
    %v524 = vmax.f32 %v502, 0.0
    %v525 = vmax.f32 %v507, 0.0
    %v526 = vmax.f32 %v510, 0.0
    %v527 = vmax.f32 %v515, 0.0
    %v528 = vmax.f32 %v518, 0.0
    %v529 = vld [vmem:[%s5] sm:$0xff]
    %v530 = vld [vmem:[%s5 + $0x8] sm:$0xff]
    %v531 = vld [vmem:[%s5 + $0x10] sm:$0xff]
    %v532 = vld [vmem:[%s5 + $0x18] sm:$0xff]
    %v533 = vld [vmem:[%s5 + $0x20] sm:$0xff]
    %v534 = vld [vmem:[%s5 + $0x28] sm:$0xff]
    %v535 = vld [vmem:[%s5 + $0x30] sm:$0xff]
    %v536 = vld [vmem:[%s5 + $0x38] sm:$0xff]
    %538 = vset.pattern.permute.xlu0 0
    %539 = vperm.xlu0 %538, %v529
    %v540 = vpop.permute.xlu0 %539
    %543 = vset.pattern.permute.xlu0 0
    %544 = vperm.xlu0 %543, %v530
    %v545 = vpop.permute.xlu0 %544
    %548 = vset.pattern.permute.xlu0 0
    %549 = vperm.xlu0 %548, %v531
    %v550 = vpop.permute.xlu0 %549
    %553 = vset.pattern.permute.xlu0 0
    %554 = vperm.xlu0 %553, %v532
    %v555 = vpop.permute.xlu0 %554
    %558 = vset.pattern.permute.xlu0 0
    %559 = vperm.xlu0 %558, %v533
    %v560 = vpop.permute.xlu0 %559
    %563 = vset.pattern.permute.xlu0 0
    %564 = vperm.xlu0 %563, %v534
    %v565 = vpop.permute.xlu0 %564
    %568 = vset.pattern.permute.xlu0 0
    %569 = vperm.xlu0 %568, %v535
    %v570 = vpop.permute.xlu0 %569
    %573 = vset.pattern.permute.xlu0 0
    %574 = vperm.xlu0 %573, %v536
    %v575 = vpop.permute.xlu0 %574
    %v577 = vmul.f32 %v521, %v540
    %v578 = vmul.f32 %v522, %v545
    %v579 = vmul.f32 %v523, %v550
    %v580 = vmul.f32 %v524, %v555
    %v581 = vmul.f32 %v525, %v560
    %v582 = vmul.f32 %v526, %v565
    %v583 = vmul.f32 %v527, %v570
    %v584 = vmul.f32 %v528, %v575
    %v585 = vadd.f32 %v577, %v578
    %v586 = vadd.f32 %v585, %v579
    %v587 = vadd.f32 %v586, %v580
    %v588 = vadd.f32 %v587, %v581
    %v589 = vadd.f32 %v588, %v582
    %v590 = vadd.f32 %v589, %v583
    %v591 = vadd.f32 %v590, %v584
    %v592 = vrot.slane %v591, 4
    %v593 = vadd.f32 %v591, %v592
    %v594 = vrot.slane %v593, 2
    %v595 = vadd.f32 %v593, %v594
    %v596 = vrot.slane %v595, 1
    %v597 = vadd.f32 %v595, %v596
    %v598 = vld [vmem:[#allocation2] sm:$0x1]
    %600 = vset.pattern.permute.xlu0 0
    %601 = vperm.xlu0 %600, %v598
    %v602 = vpop.permute.xlu0 %601
    %v604 = vlaneseq
    %v605 = vshrl.u32 %v604, 7
    %v606 = vsub.s32 0, %v605
    %v607 = vrot.slane %v602, %v606
    %v608 = vadd.f32 %v597, %v607
    %v609 = vsub.f32 0.0, %v608
    %v610 = vmul.f32 %v609, 1.442695
    %v611 = vpow.pop %v610
    %v612 = vadd.f32 %v611, 1.0
    %v613 = vrcp.pop %v612
    %v614 = vmul.f32 1.0, %v613
    %615 = vst [vmem:[#allocation3] sm:$0x1] %v614
    // Predicated region
    $region30: #{tpu_custom_call.1} parent=1 // pred_check
      _
    $region31: #{tpu_custom_call.1} parent=1 // pred_check_branch
      %617 = sbr.rel (0) target = $region33
    $region32: #{tpu_custom_call.1} parent=1 // pred_region
      %s619 = ssub.s32 16, 16
      %620 = vsyncadd [#allocation4], %s619
      %s622 = sshll.u32 [#allocation3], 4
      %s623 = int_to_ptr.vmem [resolvable:$true] %s622
      %625 = dma.vmem_to_hbm [thread:$0]  %s623, 16, %s7, [#allocation4]
    $region33: #{tpu_custom_call.1} parent=1 // pred_fallthru
      _
    // Predicated region
    $region34: #{tpu_custom_call.1} parent=1 // pred_check
      _
    $region35: #{tpu_custom_call.1} parent=1 // pred_check_branch
      %627 = sbr.rel (0) target = $region37
    $region36: #{tpu_custom_call.1} parent=1 // pred_region
      %628 = dma.done [#allocation4], 16
    $region37: #{tpu_custom_call.1} parent=1 // pred_fallthru
      _
    %629 = vsyncpa [#allocation4], 1

</llo_original>
